<compile_context>
chip_gen: v6e
topology: v6e:2x2x1
jax: 0.10.0
libtpu: 0.0.40
codegen_flags: <defaults>
</compile_context>

<pallas_src>
import functools

import jax
import jax.numpy as jnp
from jax import lax
from jax.experimental import pallas as pl
from jax.experimental.pallas import tpu as pltpu


def _round_up(v: int, m: int) -> int:
    return ((v + m - 1) // m) * m


def _vmem_capacity_bytes() -> int:
    """Physical VMEM per TensorCore; conservative fallback if query fails."""
    try:
        info = pltpu.get_tpu_info()
        cap = getattr(info, "vmem_capacity_bytes", None)
        if cap:
            return int(cap)
    except Exception:
        pass
    return 64 * 1024 * 1024  # conservative (v7x per-TC)


# --------------------------------------------------------------------------
# Path A: spatial axis fits in one tile -> single-pass lane reduction.
# --------------------------------------------------------------------------
def _mil_rows_kernel(x_ref, o_ref, *, mil_type: int):
    """x_ref: (TR, S) tile in VMEM, o_ref: (TR, 1). Reduce over lanes (S)."""
    if mil_type == 0:
        # max is exact in the input dtype -> skip the f32 upcast entirely.
        red = jnp.max(x_ref[...], axis=-1, keepdims=True)
    elif mil_type == 1:
        x = x_ref[...].astype(jnp.float32)
        prob = 1.0 - jnp.prod(1.0 - x, axis=-1, keepdims=True)
        red = jnp.maximum(prob, jnp.max(x, axis=-1, keepdims=True))
    elif mil_type == 2:
        x = x_ref[...].astype(jnp.float32)
        red = jnp.sum(x, axis=-1, keepdims=True) * (1.0 / x.shape[-1])
    else:
        raise ValueError(f"unsupported mil_type {mil_type}")
    o_ref[...] = red.astype(o_ref.dtype)


# --------------------------------------------------------------------------
# Path B: spatial axis tiled -> running accumulators in VMEM scratch.
# --------------------------------------------------------------------------
def _mil_acc_kernel(x_ref, o_ref, *accs, mil_type: int, s_total: int):
    """x_ref: (TR, TS) tile; reduction over the spatial grid axis (axis 1)."""
    k = pl.program_id(1)
    nk = pl.num_programs(1)
    ts = x_ref.shape[-1]

    if mil_type == 0:
        (max_acc,) = accs
        prod_acc = sum_acc = None
    elif mil_type == 1:
        max_acc, prod_acc = accs
        sum_acc = None
    else:
        (sum_acc,) = accs
        max_acc = prod_acc = None

    @pl.when(k == 0)
    def _():
        if mil_type in (0, 1):
            max_acc[...] = jnp.full_like(max_acc, -jnp.inf)
        if mil_type == 1:
            prod_acc[...] = jnp.ones_like(prod_acc)
        if mil_type == 2:
            sum_acc[...] = jnp.zeros_like(sum_acc)

    def update(masked: bool):
        x = x_ref[...]
        if mil_type != 0:
            x = x.astype(jnp.float32)  # f32 accumulation for prod / sum
        if masked:
            col = k * ts + lax.broadcasted_iota(jnp.int32, x.shape, 1)
            valid = col < s_total
        if mil_type in (0, 1):
            xm = jnp.where(valid, x, -jnp.inf) if masked else x
            tile_max = jnp.max(xm, axis=-1, keepdims=True).astype(jnp.float32)
            max_acc[...] = jnp.maximum(max_acc[...], tile_max)
        if mil_type == 1:
            om = 1.0 - x
            if masked:
                om = jnp.where(valid, om, 1.0)
            prod_acc[...] = prod_acc[...] * jnp.prod(om, axis=-1, keepdims=True)
        if mil_type == 2:
            xs = jnp.where(valid, x, 0.0) if masked else x
            sum_acc[...] = sum_acc[...] + jnp.sum(xs, axis=-1, keepdims=True)

    ragged = (s_total % ts) != 0
    if ragged:
        # Masking (iota + compare + selects) only on the final spatial tile.
        @pl.when(k < nk - 1)
        def _():
            update(False)

        @pl.when(k == nk - 1)
        def _():
            update(True)
    else:
        update(False)

    @pl.when(k == nk - 1)
    def _():
        if mil_type == 0:
            o_ref[...] = max_acc[...].astype(o_ref.dtype)
        elif mil_type == 1:
            prob = 1.0 - prod_acc[...]
            o_ref[...] = jnp.maximum(prob, max_acc[...]).astype(o_ref.dtype)
        else:
            o_ref[...] = (sum_acc[...] * (1.0 / s_total)).astype(o_ref.dtype)


# --------------------------------------------------------------------------
# Tile planning (generation- and dtype-aware).
# --------------------------------------------------------------------------
_MIN_GRID_STEPS = 4      # target pipeline depth on the row axis
_MIN_ROW_STRIPE = 512    # don't shrink row stripes below ~512 rows


def _tile_plan(R: int, S: int, itemsize: int, mil_type: int):
    """Returns (row_tile, s_tile_or_None, vmem_limit_bytes)."""
    pack = max(8, 32 // itemsize)  # sublane packing: f32->8, bf16->16, i8->32
    # mil 1/2 materialize an f32 copy of sub-32-bit inputs inside the kernel.
    eff = itemsize + (4 if (mil_type != 0 and itemsize < 4) else 0)

    cap = _vmem_capacity_bytes()
    vmem_limit = min((cap * 3) // 4, 96 * 1024 * 1024)   # 96 MiB v5e/v6e, 48 MiB v7x
    budget = vmem_limit // 4                              # per input buffer (x2 double-buffered)

    if pack * S * eff <= budget:
        # ---- Path A: whole spatial extent per row stripe. ----
        tr = min(R, max(pack, budget // (S * eff)))
        # Enforce >= ~4 grid steps on big slabs (pipelining + v7x 2-TC split),
        # keeping stripes >= ~512 rows so per-step overhead stays amortized.
        min_rows = _round_up(_MIN_ROW_STRIPE, pack)
        if R > min_rows:
            target = max(_round_up(pl.cdiv(R, _MIN_GRID_STEPS), pack), min_rows)
            tr = min(tr, target)
        tr = min(tr, R)
        if tr < R:
            tr = max(pack, (tr // pack) * pack)
        return tr, None, vmem_limit

    # ---- Path B: spatial axis too wide; tile it too. ----
    tr = min(R, _round_up(256, pack))
    if tr < R:
        tr = max(pack, (tr // pack) * pack)
    ts = (budget // (tr * eff)) // 128 * 128
    ts = max(128, min(ts, S))
    return tr, ts, vmem_limit


def mil_forward(x: jax.Array, mil_type: int, *,
                row_tile: int | None = None,
                s_tile: int | None = None) -> jax.Array:
    """Pallas implementation of MIL(mil_type).forward(x), x is NCHW."""
    if mil_type not in (0, 1, 2):
        raise ValueError(f"unsupported mil_type {mil_type}")

    B, C, H, W = x.shape
    R, S = B * C, H * W
    x2 = x.reshape(R, S)
    itemsize = jnp.dtype(x.dtype).itemsize

    auto_tr, auto_ts, vmem_limit = _tile_plan(R, S, itemsize, mil_type)
    tr = row_tile if row_tile is not None else auto_tr
    ts = s_tile if s_tile is not None else auto_ts
    tr = min(tr, R)

    flops = {0: R * S, 1: 5 * R * S, 2: R * S + R}[mil_type]
    cost = pl.CostEstimate(
        flops=flops,
        transcendentals=0,
        bytes_accessed=R * S * itemsize + R * itemsize,
    )

    if ts is None or ts >= S:
        # Path A: 1-D grid over rows, full spatial extent per tile.
        out = pl.pallas_call(
            functools.partial(_mil_rows_kernel, mil_type=mil_type),
            out_shape=jax.ShapeDtypeStruct((R, 1), x.dtype),
            grid=(pl.cdiv(R, tr),),
            in_specs=[pl.BlockSpec((tr, S), lambda i: (i, 0))],
            out_specs=pl.BlockSpec((tr, 1), lambda i: (i, 0)),
            compiler_params=pltpu.CompilerParams(
                dimension_semantics=("parallel",),
                vmem_limit_bytes=vmem_limit),
            cost_estimate=cost,
        )(x2)
    else:
        # Path B: 2-D grid (rows parallel, spatial reduction axis last).
        n_accs = 2 if mil_type == 1 else 1
        out = pl.pallas_call(
            functools.partial(_mil_acc_kernel, mil_type=mil_type, s_total=S),
            out_shape=jax.ShapeDtypeStruct((R, 1), x.dtype),
            grid=(pl.cdiv(R, tr), pl.cdiv(S, ts)),
            in_specs=[pl.BlockSpec((tr, ts), lambda i, k: (i, k))],
            out_specs=pl.BlockSpec((tr, 1), lambda i, k: (i, 0)),
            scratch_shapes=[pltpu.VMEM((tr, 1), jnp.float32)
                            for _ in range(n_accs)],
            compiler_params=pltpu.CompilerParams(
                dimension_semantics=("parallel", "arbitrary"),
                vmem_limit_bytes=vmem_limit),
            cost_estimate=cost,
        )(x2)

    return out.reshape(B, C)


def _mil_reference(x: jax.Array, mil_type: int) -> jax.Array:
    """Plain-JAX mirror of the PyTorch forward, for verification."""
    B, C = x.shape[0], x.shape[1]
    if mil_type == 0:
        return jnp.max(jnp.max(x, axis=3), axis=2).reshape(B, C)
    elif mil_type == 1:
        prob = 1.0 - jnp.prod(jnp.prod(1.0 - x, axis=3), axis=2).reshape(B, C)
        max_prob = jnp.max(jnp.max(x, axis=3), axis=2).reshape(B, C)
        return jnp.maximum(prob, max_prob)
    elif mil_type == 2:
        return jnp.mean(jnp.mean(x, axis=3), axis=2).reshape(B, C)
    raise ValueError(mil_type)


if __name__ == "__main__":
    ok = True

    # Small shapes consistent with the module: NCHW = (2, 4, 16, 16).
    # Values in (0, 1) since mil_type == 1 treats inputs as probabilities.
    x = jax.random.uniform(jax.random.PRNGKey(0), (2, 4, 16, 16),
                           dtype=jnp.float32)
    for mil_type in (0, 1, 2):
        got = jax.block_until_ready(mil_forward(x, mil_type))
        want = _mil_reference(x, mil_type)
        if got.shape != (2, 4) or not jnp.allclose(got, want,
                                                   rtol=1e-5, atol=1e-5):
            ok = False
            print(f"[rows path] mil_type={mil_type}: mismatch "
                  f"(shape {got.shape}, max err "
                  f"{float(jnp.max(jnp.abs(got - want)))})")

    # Exercise the spatial-accumulator path (forced small spatial tile),
    # aligned spatial size (256 % 128 == 0).
    for mil_type in (0, 1, 2):
        got = jax.block_until_ready(
            mil_forward(x, mil_type, row_tile=8, s_tile=128))
        want = _mil_reference(x, mil_type)
        if not jnp.allclose(got, want, rtol=1e-5, atol=1e-5):
            ok = False
            print(f"[acc path, aligned] mil_type={mil_type}: mismatch, max "
                  f"err {float(jnp.max(jnp.abs(got - want)))}")

    # Exercise the accumulator path with a ragged spatial size (144 % 128 != 0)
    # to cover the pl.when-gated identity-masking of the padded last tile.
    x2 = jax.random.uniform(jax.random.PRNGKey(1), (2, 4, 12, 12),
                            dtype=jnp.float32)
    for mil_type in (0, 1, 2):
        got = jax.block_until_ready(
            mil_forward(x2, mil_type, row_tile=8, s_tile=128))
        want = _mil_reference(x2, mil_type)
        if not jnp.allclose(got, want, rtol=1e-5, atol=1e-5):
            ok = False
            print(f"[acc path, ragged] mil_type={mil_type}: mismatch, max "
                  f"err {float(jnp.max(jnp.abs(got - want)))}")

    # bf16 input exercises the no-upcast max path and dtype-aware tiling.
    xb = x.astype(jnp.bfloat16)
    for mil_type in (0, 1, 2):
        got = jax.block_until_ready(mil_forward(xb, mil_type))
        want = _mil_reference(xb.astype(jnp.float32), mil_type)
        if not jnp.allclose(got.astype(jnp.float32), want,
                            rtol=2e-2, atol=2e-2):
            ok = False
            print(f"[bf16 rows path] mil_type={mil_type}: mismatch, max "
                  f"err {float(jnp.max(jnp.abs(got.astype(jnp.float32) - want)))}")

    if ok:
        print("KERNEL_OK")
</pallas_src>

<mosaic_0001>
module attributes {stable_mosaic.version = 11 : i64} {
  func.func @_mil_rows_kernel(%arg0: i32, %arg1: memref<8x256xf32, #tpu.memory_space<vmem>>, %arg2: memref<8x1xf32, #tpu.memory_space<vmem>>) attributes {dimension_semantics = [#tpu.dimension_semantics<parallel>], iteration_bounds = array<i64: 1>, scalar_prefetch = 0 : i64, scratch_operands = 0 : i64, tpu.core_type = #tpu.core_type<tc>, window_params = [{transform_indices = @transform_0, window_bounds = array<i64: 8, 256>}, {transform_indices = @transform_1, window_bounds = array<i64: 8, 1>}]} {
    %c0 = arith.constant 0 : index
    %c0_0 = arith.constant 0 : index
    %0 = vector.load %arg1[%c0, %c0_0] : memref<8x256xf32, #tpu.memory_space<vmem>>, vector<8x256xf32>
    %cst = arith.constant dense<0xFF800000> : vector<8xf32>
    %1 = vector.multi_reduction <maximumf>, %0, %cst [1] : vector<8x256xf32> to vector<8xf32>
    %2 = vector.shape_cast %1 : vector<8xf32> to vector<8x1xf32>
    %c0_1 = arith.constant 0 : index
    %c0_2 = arith.constant 0 : index
    %3 = vector.load %arg2[%c0_1, %c0_2] : memref<8x1xf32, #tpu.memory_space<vmem>>, vector<8x1xf32>
    tpu.vector_store %arg2[%c0_1, %c0_2], %2 {strides = array<i32>} : memref<8x1xf32, #tpu.memory_space<vmem>>, vector<8x1xf32>,
    return
  }
  func.func @transform_0(%arg0: i32) -> (i32, i32) {
    %c0_i32 = arith.constant 0 : i32
    %c0_i32_0 = arith.constant 0 : i32
    return %arg0, %c0_i32 : i32, i32
  }
  func.func @transform_1(%arg0: i32) -> (i32, i32) {
    %c0_i32 = arith.constant 0 : i32
    %c0_i32_0 = arith.constant 0 : i32
    return %arg0, %c0_i32 : i32, i32
  }
}

</mosaic_0001>

<llo_original>
// kernel: tpu_custom_call.1
$region0: #{tpu_custom_call.1}
  #allocation0 [shape = 'u32[]', space=smem, size = 0x4, offset = 0x4, fixed_abs, tag = 'smem constant byte address 0x4 - core index']
  #allocation1 [shape = 'u32[144,128]{1,0:T(1,128)}', space=vmem, size = 0x12000, scoped, tag = 'internal scratch']
  %s0 = inlined_call_operand.hbm [shape: f32[8,256], index: 0, kind: input, shape index: {}]
  %s1 = inlined_call_operand.vmem [shape: f32[8,1], index: 1, kind: output, shape index: {}]
  %s2 = sld [smem:[#allocation0]]
  $region18: #{tpu_custom_call.1} parent=0
    _
  %s4 = ssub.s32 1, %s2
  %s5 = scalar_select 0, %s4, %s2
  $region1: #{tpu_custom_call.1} parent=0
    #allocation2 [shape = 'u8[8192]{0}', space=vmem, size = 0x2000, scoped, tag = 'input window, operand 0, single buffered']
    #allocation3 [shape = 's32[1]{0}', space=sflag, size = 0x4, scoped, tag = 'scoped memory for tpu_custom_call.1']
    %6 = vsyncpa [#allocation3], 0
    // Predicated region
    $region2: #{tpu_custom_call.1} parent=1 // pred_check
      _
    $region3: #{tpu_custom_call.1} parent=1 // pred_check_branch
      %8 = sbr.rel (0) target = $region5
    $region4: #{tpu_custom_call.1} parent=1 // pred_region
      %s10 = ssub.s32 256, 256
      %11 = vsyncadd [#allocation3], %s10
      %s13 = sshll.u32 [#allocation2], 4
      %s14 = int_to_ptr.vmem [resolvable:$true] %s13
      %16 = dma.hbm_to_vmem [thread:$0]  %s0, 256, %s14, [#allocation3]
    $region5: #{tpu_custom_call.1} parent=1 // pred_fallthru
      _
    // Predicated region
    $region6: #{tpu_custom_call.1} parent=1 // pred_check
      _
    $region7: #{tpu_custom_call.1} parent=1 // pred_check_branch
      %18 = sbr.rel (0) target = $region9
    $region8: #{tpu_custom_call.1} parent=1 // pred_region
      %19 = dma.done [#allocation3], 256
    $region9: #{tpu_custom_call.1} parent=1 // pred_fallthru
      _
    %v20 = vld [vmem:[#allocation2] sm:$0xff]
    %v21 = vld [vmem:[#allocation2 + $0x8] sm:$0xff]
    %v22 = vmax.f32 %v20, %v21
    %23 = vmax.xlane.f32.xlu0 %v22
    %v24 = vpop.xlane.xlu0 %23
    %vm25 = vcmask 7168
    %26 = vst.msk [vmem:[%s1] sm:$0xff] %vm25, %v24
    // Predicated region
    $region10: #{tpu_custom_call.1} parent=1 // pred_check
      _
    $region11: #{tpu_custom_call.1} parent=1 // pred_check_branch
      %28 = sbr.rel (0) target = $region13
    $region12: #{tpu_custom_call.1} parent=1 // pred_region
      _
    $region13: #{tpu_custom_call.1} parent=1 // pred_fallthru
      _
    // Predicated region
    $region14: #{tpu_custom_call.1} parent=1 // pred_check
      _
    $region15: #{tpu_custom_call.1} parent=1 // pred_check_branch
      %30 = sbr.rel (0) target = $region17
    $region16: #{tpu_custom_call.1} parent=1 // pred_region
      _
    $region17: #{tpu_custom_call.1} parent=1 // pred_fallthru
      _
    %31 = vsyncpa [#allocation3], 1

</llo_original>
